<compile_context>
chip_gen: v5e
topology: v5e:2x2
jax: 0.10.0
libtpu: 0.0.40
codegen_flags: <defaults>
</compile_context>

<pallas_src>
import functools

import jax
import jax.numpy as jnp
import numpy as np
from jax.experimental import pallas as pl
from jax.experimental.pallas import tpu as pltpu

EPS = 1e-6
LOG_STD_MAX = 2.0
LOG_STD_MIN = -20.0
LEAKY_SLOPE = 0.01  # torch.nn.LeakyReLU default negative_slope
_HALF_LOG_2PI = 0.5 * float(np.log(2.0 * np.pi))


def _round_up(x, m):
    return ((x + m - 1) // m) * m


def _policy_kernel(x_ref, w1_ref, b1_ref, w2_ref, b2_ref,
                   w3m_ref, b3m_ref, w3s_ref, b3s_ref, eps_ref,
                   pi_ref, logp_ref, mu_ref, logstd_ref, *, d_action):
    cdt = w1_ref.dtype  # matmul input dtype (bf16); accumulation is f32 on MXU

    # layer 1: Linear + LeakyReLU
    h = jnp.dot(x_ref[...].astype(cdt), w1_ref[...],
                preferred_element_type=jnp.float32) + b1_ref[...]
    h = jnp.where(h > 0, h, LEAKY_SLOPE * h)

    # layer 2: Linear + LeakyReLU
    h = jnp.dot(h.astype(cdt), w2_ref[...],
                preferred_element_type=jnp.float32) + b2_ref[...]
    h = jnp.where(h > 0, h, LEAKY_SLOPE * h)

    # layer 3: two lane-aligned heads (mu, raw log_std)
    h = h.astype(cdt)
    mu = jnp.dot(h, w3m_ref[...], preferred_element_type=jnp.float32) + b3m_ref[...]
    log_std = jnp.dot(h, w3s_ref[...], preferred_element_type=jnp.float32) + b3s_ref[...]

    # squash log_std into [LOG_STD_MIN, LOG_STD_MAX]
    log_std = jnp.tanh(log_std)
    log_std = LOG_STD_MIN + 0.5 * (LOG_STD_MAX - LOG_STD_MIN) * (log_std + 1.0)
    std = jnp.exp(log_std)

    # reparameterized sample: pi = mu + std * eps, eps ~ N(0, 1)
    eps = eps_ref[...]
    pi = mu + std * eps

    mu_t = jnp.tanh(mu)
    pi_t = jnp.tanh(pi)

    # Normal(mu, std).log_prob(pi) minus tanh-squash correction, fused into a
    # single lane reduction.  (pi - mu)/std == eps => quadratic term -0.5*eps^2.
    log_prob = -0.5 * (eps * eps) - log_std - _HALF_LOG_2PI
    corr = jnp.log(jnp.clip(1.0 - pi_t * pi_t, 0.0, 1.0) + EPS)
    total = log_prob - corr

    # mask padded action lanes out of the reduction
    lane = jax.lax.broadcasted_iota(jnp.int32, total.shape, 1)
    total = jnp.where(lane < d_action, total, 0.0)

    pi_ref[...] = pi_t
    logp_ref[...] = jnp.sum(total, axis=1, keepdims=True)
    mu_ref[...] = mu_t
    logstd_ref[...] = log_std


def gaussian_policy_forward(state, params, eps, *, block_b=512):
    """state: (B, d_state) f32; eps: (B, d_action) f32 standard-normal noise.

    params: (w1, b1, w2, b2, w3_mu, b3_mu, w3_logstd, b3_logstd) from
    make_params(): weights (in, out) in bf16 with hidden/action dims padded to
    multiples of 128 (zero padding), biases in f32.
    """
    w1, b1, w2, b2, w3m, b3m, w3s, b3s = params
    B, d_state = state.shape
    d_action = eps.shape[1]
    h_pad = w1.shape[1]
    a_pad = w3m.shape[1]

    assert block_b % 8 == 0
    tb = min(block_b, _round_up(B, 8))
    b_pad = _round_up(B, tb)

    state_p = jnp.pad(state.astype(jnp.float32), ((0, b_pad - B), (0, 0)))
    eps_p = jnp.pad(eps.astype(jnp.float32),
                    ((0, b_pad - B), (0, a_pad - d_action)))

    grid = (b_pad // tb,)

    def batch_spec(lanes):
        return pl.BlockSpec((tb, lanes), lambda i: (i, 0))

    def resident_spec(arr):  # weights/biases: fetched once, stay in VMEM
        return pl.BlockSpec(arr.shape, lambda i: (0, 0))

    in_arrays = (state_p, w1, b1, w2, b2, w3m, b3m, w3s, b3s, eps_p)
    in_specs = [
        batch_spec(d_state),
        resident_spec(w1), resident_spec(b1),
        resident_spec(w2), resident_spec(b2),
        resident_spec(w3m), resident_spec(b3m),
        resident_spec(w3s), resident_spec(b3s),
        batch_spec(a_pad),
    ]
    out_specs = (batch_spec(a_pad), batch_spec(1),
                 batch_spec(a_pad), batch_spec(a_pad))
    out_shapes = (
        jax.ShapeDtypeStruct((b_pad, a_pad), jnp.float32),  # pi (tanh-squashed)
        jax.ShapeDtypeStruct((b_pad, 1), jnp.float32),      # logp_pi
        jax.ShapeDtypeStruct((b_pad, a_pad), jnp.float32),  # mu (tanh-squashed)
        jax.ShapeDtypeStruct((b_pad, a_pad), jnp.float32),  # log_std
    )

    flops = 2 * b_pad * h_pad * (d_state + h_pad + 2 * a_pad)
    transcendentals = 5 * b_pad * a_pad
    bytes_accessed = sum(int(np.prod(a.shape)) * a.dtype.itemsize for a in in_arrays)
    bytes_accessed += sum(int(np.prod(s.shape)) * 4 for s in out_shapes)

    kernel = functools.partial(_policy_kernel, d_action=d_action)
    pi, logp_pi, mu, log_std = pl.pallas_call(
        kernel,
        grid=grid,
        in_specs=in_specs,
        out_specs=out_specs,
        out_shape=out_shapes,
        compiler_params=pltpu.CompilerParams(
            dimension_semantics=("parallel",),
            vmem_limit_bytes=48 * 1024 * 1024,
        ),
        cost_estimate=pl.CostEstimate(
            flops=int(flops),
            transcendentals=int(transcendentals),
            bytes_accessed=int(bytes_accessed)),
    )(*in_arrays)

    return (pi[:B, :d_action], logp_pi[:B], mu[:B, :d_action],
            log_std[:B, :d_action])


def _orthogonal(key, out_dim, in_dim):
    """Orthogonal init (like nn.init.orthogonal_); returns (in, out) layout."""
    a = jax.random.normal(key, (max(out_dim, in_dim), min(out_dim, in_dim)),
                          dtype=jnp.float32)
    q, r = jnp.linalg.qr(a)
    q = q * jnp.sign(jnp.diagonal(r))
    w = q if out_dim >= in_dim else q.T          # (out, in)
    return jnp.asarray(w.T, dtype=jnp.float32)   # (in, out) for x @ W


def make_params(key, d_state, d_action, n_hidden, weight_dtype=jnp.bfloat16):
    """Padded, pre-split params.  Hidden / per-head action dims are padded to
    multiples of 128 with zeros, so results are unchanged (padded lanes are
    sliced off / masked in the wrapper and kernel)."""
    k1, k2, k3 = jax.random.split(key, 3)
    h_pad = _round_up(n_hidden, 128)
    a_pad = _round_up(d_action, 128)

    w1 = _orthogonal(k1, n_hidden, d_state)           # (d_state, n_hidden)
    w2 = _orthogonal(k2, n_hidden, n_hidden)          # (n_hidden, n_hidden)
    w3 = _orthogonal(k3, 2 * d_action, n_hidden)      # (n_hidden, 2*d_action)
    w3m, w3s = w3[:, :d_action], w3[:, d_action:]     # split heads (mu first)

    def pad(w, rows, cols):
        return jnp.pad(w, ((0, rows - w.shape[0]), (0, cols - w.shape[1])))

    w1 = pad(w1, d_state, h_pad).astype(weight_dtype)
    w2 = pad(w2, h_pad, h_pad).astype(weight_dtype)
    w3m = pad(w3m, h_pad, a_pad).astype(weight_dtype)
    w3s = pad(w3s, h_pad, a_pad).astype(weight_dtype)

    b1 = jnp.zeros((1, h_pad), jnp.float32)
    b2 = jnp.zeros((1, h_pad), jnp.float32)
    b3m = jnp.zeros((1, a_pad), jnp.float32)
    b3s = jnp.zeros((1, a_pad), jnp.float32)
    return (w1, b1, w2, b2, w3m, b3m, w3s, b3s)


def _reference(state, params, eps):
    """Plain-JAX replica of the kernel math (same padded bf16 weights)."""
    w1, b1, w2, b2, w3m, b3m, w3s, b3s = params
    d_action = eps.shape[1]
    cdt = w1.dtype
    h = jnp.dot(state.astype(cdt), w1, preferred_element_type=jnp.float32) + b1
    h = jnp.where(h > 0, h, LEAKY_SLOPE * h)
    h = jnp.dot(h.astype(cdt), w2, preferred_element_type=jnp.float32) + b2
    h = jnp.where(h > 0, h, LEAKY_SLOPE * h)
    h = h.astype(cdt)
    mu = (jnp.dot(h, w3m, preferred_element_type=jnp.float32) + b3m)[:, :d_action]
    log_std = (jnp.dot(h, w3s, preferred_element_type=jnp.float32) + b3s)[:, :d_action]
    log_std = jnp.tanh(log_std)
    log_std = LOG_STD_MIN + 0.5 * (LOG_STD_MAX - LOG_STD_MIN) * (log_std + 1.0)
    std = jnp.exp(log_std)
    pi = mu + std * eps
    logp_pi = jnp.sum(-0.5 * eps * eps - log_std - _HALF_LOG_2PI,
                      axis=1, keepdims=True)
    mu_t, pi_t = jnp.tanh(mu), jnp.tanh(pi)
    corr = jnp.log(jnp.clip(1.0 - pi_t * pi_t, 0.0, 1.0) + EPS)
    logp_pi = logp_pi - jnp.sum(corr, axis=1, keepdims=True)
    return pi_t, logp_pi, mu_t, log_std


if __name__ == "__main__":
    B, d_state, d_action, n_hidden = 8, 16, 4, 32

    key = jax.random.PRNGKey(0)
    k_state, k_eps, k_params = jax.random.split(key, 3)

    state = jax.random.normal(k_state, (B, d_state), dtype=jnp.float32)
    eps = jax.random.normal(k_eps, (B, d_action), dtype=jnp.float32)
    params = make_params(k_params, d_state, d_action, n_hidden)

    pi, logp_pi, mu, log_std = gaussian_policy_forward(state, params, eps)
    jax.block_until_ready((pi, logp_pi, mu, log_std))

    # shapes match the PyTorch module's outputs
    assert pi.shape == (B, d_action)
    assert logp_pi.shape == (B, 1)
    assert mu.shape == (B, d_action)
    assert log_std.shape == (B, d_action)

    # numerical sanity vs. a plain-JAX replica of the same math
    r_pi, r_logp, r_mu, r_ls = _reference(state, params, eps)
    for got, ref in ((pi, r_pi), (logp_pi, r_logp), (mu, r_mu), (log_std, r_ls)):
        err = float(jnp.max(jnp.abs(got - ref)))
        assert err < 5e-2, err

    print("KERNEL_OK")
</pallas_src>

<mosaic_0001>
module attributes {stable_mosaic.version = 11 : i64} {
  func.func @_policy_kernel(%arg0: i32, %arg1: memref<8x16xf32, #tpu.memory_space<vmem>>, %arg2: memref<16x128xbf16, #tpu.memory_space<vmem>>, %arg3: memref<1x128xf32, #tpu.memory_space<vmem>>, %arg4: memref<128x128xbf16, #tpu.memory_space<vmem>>, %arg5: memref<1x128xf32, #tpu.memory_space<vmem>>, %arg6: memref<128x128xbf16, #tpu.memory_space<vmem>>, %arg7: memref<1x128xf32, #tpu.memory_space<vmem>>, %arg8: memref<128x128xbf16, #tpu.memory_space<vmem>>, %arg9: memref<1x128xf32, #tpu.memory_space<vmem>>, %arg10: memref<8x128xf32, #tpu.memory_space<vmem>>, %arg11: memref<8x128xf32, #tpu.memory_space<vmem>>, %arg12: memref<8x1xf32, #tpu.memory_space<vmem>>, %arg13: memref<8x128xf32, #tpu.memory_space<vmem>>, %arg14: memref<8x128xf32, #tpu.memory_space<vmem>>) attributes {dimension_semantics = [#tpu.dimension_semantics<parallel>], iteration_bounds = array<i64: 1>, scalar_prefetch = 0 : i64, scratch_operands = 0 : i64, tpu.core_type = #tpu.core_type<tc>, window_params = [{transform_indices = @transform_0, window_bounds = array<i64: 8, 16>}, {pipeline_mode = #tpu.pipeline_mode<synchronous>, transform_indices = @transform_1, window_bounds = array<i64: 16, 128>}, {pipeline_mode = #tpu.pipeline_mode<synchronous>, transform_indices = @transform_2, window_bounds = array<i64: 1, 128>}, {pipeline_mode = #tpu.pipeline_mode<synchronous>, transform_indices = @transform_3, window_bounds = array<i64: 128, 128>}, {pipeline_mode = #tpu.pipeline_mode<synchronous>, transform_indices = @transform_4, window_bounds = array<i64: 1, 128>}, {pipeline_mode = #tpu.pipeline_mode<synchronous>, transform_indices = @transform_5, window_bounds = array<i64: 128, 128>}, {pipeline_mode = #tpu.pipeline_mode<synchronous>, transform_indices = @transform_6, window_bounds = array<i64: 1, 128>}, {pipeline_mode = #tpu.pipeline_mode<synchronous>, transform_indices = @transform_7, window_bounds = array<i64: 128, 128>}, {pipeline_mode = #tpu.pipeline_mode<synchronous>, transform_indices = @transform_8, window_bounds = array<i64: 1, 128>}, {transform_indices = @transform_9, window_bounds = array<i64: 8, 128>}, {transform_indices = @transform_10, window_bounds = array<i64: 8, 128>}, {transform_indices = @transform_11, window_bounds = array<i64: 8, 1>}, {transform_indices = @transform_12, window_bounds = array<i64: 8, 128>}, {transform_indices = @transform_13, window_bounds = array<i64: 8, 128>}]} {
    %c0 = arith.constant 0 : index
    %c0_0 = arith.constant 0 : index
    %0 = vector.load %arg1[%c0, %c0_0] : memref<8x16xf32, #tpu.memory_space<vmem>>, vector<8x16xf32>
    %1 = arith.truncf %0 : vector<8x16xf32> to vector<8x16xbf16>
    %c0_1 = arith.constant 0 : index
    %c0_2 = arith.constant 0 : index
    %2 = vector.load %arg2[%c0_1, %c0_2] : memref<16x128xbf16, #tpu.memory_space<vmem>>, vector<16x128xbf16>
    %cst = arith.constant dense<0.000000e+00> : vector<8x128xf32>
    %3 = tpu.matmul %1, %2, %cst {dimension_numbers = #tpu.dot_dimension_numbers<[1], [0], [0], [1], [0, 0, 1, 1], [], []>} : vector<8x16xbf16>, vector<16x128xbf16>, vector<8x128xf32> -> vector<8x128xf32>
    %c0_3 = arith.constant 0 : index
    %c0_4 = arith.constant 0 : index
    %4 = vector.load %arg3[%c0_3, %c0_4] : memref<1x128xf32, #tpu.memory_space<vmem>>, vector<1x128xf32>
    %5 = vector.broadcast %4 : vector<1x128xf32> to vector<8x128xf32>
    %6 = arith.addf %3, %5 : vector<8x128xf32>
    %cst_5 = arith.constant 0.000000e+00 : f32
    %7 = vector.broadcast %cst_5 : f32 to vector<8x128xf32>
    %8 = arith.cmpf ogt, %6, %7 : vector<8x128xf32>
    %cst_6 = arith.constant 0.00999999977 : f32
    %9 = vector.broadcast %cst_6 : f32 to vector<8x128xf32>
    %10 = arith.mulf %9, %6 : vector<8x128xf32>
    %11 = arith.select %8, %6, %10 : vector<8x128xi1>, vector<8x128xf32>
    %12 = arith.truncf %11 : vector<8x128xf32> to vector<8x128xbf16>
    %c0_7 = arith.constant 0 : index
    %c0_8 = arith.constant 0 : index
    %13 = vector.load %arg4[%c0_7, %c0_8] : memref<128x128xbf16, #tpu.memory_space<vmem>>, vector<128x128xbf16>
    %cst_9 = arith.constant dense<0.000000e+00> : vector<8x128xf32>
    %14 = tpu.matmul %12, %13, %cst_9 {dimension_numbers = #tpu.dot_dimension_numbers<[1], [0], [0], [1], [0, 0, 1, 1], [], []>} : vector<8x128xbf16>, vector<128x128xbf16>, vector<8x128xf32> -> vector<8x128xf32>
    %c0_10 = arith.constant 0 : index
    %c0_11 = arith.constant 0 : index
    %15 = vector.load %arg5[%c0_10, %c0_11] : memref<1x128xf32, #tpu.memory_space<vmem>>, vector<1x128xf32>
    %16 = vector.broadcast %15 : vector<1x128xf32> to vector<8x128xf32>
    %17 = arith.addf %14, %16 : vector<8x128xf32>
    %cst_12 = arith.constant 0.000000e+00 : f32
    %18 = vector.broadcast %cst_12 : f32 to vector<8x128xf32>
    %19 = arith.cmpf ogt, %17, %18 : vector<8x128xf32>
    %cst_13 = arith.constant 0.00999999977 : f32
    %20 = vector.broadcast %cst_13 : f32 to vector<8x128xf32>
    %21 = arith.mulf %20, %17 : vector<8x128xf32>
    %22 = arith.select %19, %17, %21 : vector<8x128xi1>, vector<8x128xf32>
    %23 = arith.truncf %22 : vector<8x128xf32> to vector<8x128xbf16>
    %c0_14 = arith.constant 0 : index
    %c0_15 = arith.constant 0 : index
    %24 = vector.load %arg6[%c0_14, %c0_15] : memref<128x128xbf16, #tpu.memory_space<vmem>>, vector<128x128xbf16>
    %cst_16 = arith.constant dense<0.000000e+00> : vector<8x128xf32>
    %25 = tpu.matmul %23, %24, %cst_16 {dimension_numbers = #tpu.dot_dimension_numbers<[1], [0], [0], [1], [0, 0, 1, 1], [], []>} : vector<8x128xbf16>, vector<128x128xbf16>, vector<8x128xf32> -> vector<8x128xf32>
    %c0_17 = arith.constant 0 : index
    %c0_18 = arith.constant 0 : index
    %26 = vector.load %arg7[%c0_17, %c0_18] : memref<1x128xf32, #tpu.memory_space<vmem>>, vector<1x128xf32>
    %27 = vector.broadcast %26 : vector<1x128xf32> to vector<8x128xf32>
    %28 = arith.addf %25, %27 : vector<8x128xf32>
    %c0_19 = arith.constant 0 : index
    %c0_20 = arith.constant 0 : index
    %29 = vector.load %arg8[%c0_19, %c0_20] : memref<128x128xbf16, #tpu.memory_space<vmem>>, vector<128x128xbf16>
    %cst_21 = arith.constant dense<0.000000e+00> : vector<8x128xf32>
    %30 = tpu.matmul %23, %29, %cst_21 {dimension_numbers = #tpu.dot_dimension_numbers<[1], [0], [0], [1], [0, 0, 1, 1], [], []>} : vector<8x128xbf16>, vector<128x128xbf16>, vector<8x128xf32> -> vector<8x128xf32>
    %c0_22 = arith.constant 0 : index
    %c0_23 = arith.constant 0 : index
    %31 = vector.load %arg9[%c0_22, %c0_23] : memref<1x128xf32, #tpu.memory_space<vmem>>, vector<1x128xf32>
    %32 = vector.broadcast %31 : vector<1x128xf32> to vector<8x128xf32>
    %33 = arith.addf %30, %32 : vector<8x128xf32>
    %34 = math.tanh %33 : vector<8x128xf32>
    %cst_24 = arith.constant 1.000000e+00 : f32
    %35 = vector.broadcast %cst_24 : f32 to vector<8x128xf32>
    %36 = arith.addf %34, %35 : vector<8x128xf32>
    %cst_25 = arith.constant 1.100000e+01 : f32
    %37 = vector.broadcast %cst_25 : f32 to vector<8x128xf32>
    %38 = arith.mulf %37, %36 : vector<8x128xf32>
    %cst_26 = arith.constant -2.000000e+01 : f32
    %39 = vector.broadcast %cst_26 : f32 to vector<8x128xf32>
    %40 = arith.addf %39, %38 : vector<8x128xf32>
    %41 = math.exp %40 : vector<8x128xf32>
    %c0_27 = arith.constant 0 : index
    %c0_28 = arith.constant 0 : index
    %42 = vector.load %arg10[%c0_27, %c0_28] : memref<8x128xf32, #tpu.memory_space<vmem>>, vector<8x128xf32>
    %43 = arith.mulf %41, %42 : vector<8x128xf32>
    %44 = arith.addf %28, %43 : vector<8x128xf32>
    %45 = math.tanh %28 : vector<8x128xf32>
    %46 = math.tanh %44 : vector<8x128xf32>
    %47 = arith.mulf %42, %42 : vector<8x128xf32>
    %cst_29 = arith.constant -5.000000e-01 : f32
    %48 = vector.broadcast %cst_29 : f32 to vector<8x128xf32>
    %49 = arith.mulf %48, %47 : vector<8x128xf32>
    %50 = arith.subf %49, %40 : vector<8x128xf32>
    %cst_30 = arith.constant 0.918938517 : f32
    %51 = vector.broadcast %cst_30 : f32 to vector<8x128xf32>
    %52 = arith.subf %50, %51 : vector<8x128xf32>
    %53 = arith.mulf %46, %46 : vector<8x128xf32>
    %cst_31 = arith.constant 1.000000e+00 : f32
    %54 = vector.broadcast %cst_31 : f32 to vector<8x128xf32>
    %55 = arith.subf %54, %53 : vector<8x128xf32>
    %cst_32 = arith.constant 0.000000e+00 : f32
    %cst_33 = arith.constant 1.000000e+00 : f32
    %56 = vector.broadcast %cst_32 : f32 to vector<8x128xf32>
    %57 = arith.maximumf %56, %55 : vector<8x128xf32>
    %58 = vector.broadcast %cst_33 : f32 to vector<8x128xf32>
    %59 = arith.minimumf %58, %57 : vector<8x128xf32>
    %cst_34 = arith.constant 9.99999997E-7 : f32
    %60 = vector.broadcast %cst_34 : f32 to vector<8x128xf32>
    %61 = arith.addf %59, %60 : vector<8x128xf32>
    %62 = math.log %61 : vector<8x128xf32>
    %63 = arith.subf %52, %62 : vector<8x128xf32>
    %64 = tpu.iota {dimensions = array<i32: 1>} : vector<8x128xi32>
    %c4_i32 = arith.constant 4 : i32
    %65 = vector.broadcast %c4_i32 : i32 to vector<8x128xi32>
    %66 = arith.cmpi slt, %64, %65 : vector<8x128xi32>
    %cst_35 = arith.constant 0.000000e+00 : f32
    %67 = vector.broadcast %cst_35 : f32 to vector<8x128xf32>
    %68 = arith.select %66, %63, %67 : vector<8x128xi1>, vector<8x128xf32>
    %c0_36 = arith.constant 0 : index
    %c0_37 = arith.constant 0 : index
    %69 = vector.load %arg11[%c0_36, %c0_37] : memref<8x128xf32, #tpu.memory_space<vmem>>, vector<8x128xf32>
    tpu.vector_store %arg11[%c0_36, %c0_37], %46 {strides = array<i32>} : memref<8x128xf32, #tpu.memory_space<vmem>>, vector<8x128xf32>,
    %cst_38 = arith.constant dense<0.000000e+00> : vector<8xf32>
    %70 = vector.multi_reduction <add>, %68, %cst_38 [1] : vector<8x128xf32> to vector<8xf32>
    %71 = vector.shape_cast %70 : vector<8xf32> to vector<8x1xf32>
    %c0_39 = arith.constant 0 : index
    %c0_40 = arith.constant 0 : index
    %72 = vector.load %arg12[%c0_39, %c0_40] : memref<8x1xf32, #tpu.memory_space<vmem>>, vector<8x1xf32>
    tpu.vector_store %arg12[%c0_39, %c0_40], %71 {strides = array<i32>} : memref<8x1xf32, #tpu.memory_space<vmem>>, vector<8x1xf32>,
    %c0_41 = arith.constant 0 : index
    %c0_42 = arith.constant 0 : index
    %73 = vector.load %arg13[%c0_41, %c0_42] : memref<8x128xf32, #tpu.memory_space<vmem>>, vector<8x128xf32>
    tpu.vector_store %arg13[%c0_41, %c0_42], %45 {strides = array<i32>} : memref<8x128xf32, #tpu.memory_space<vmem>>, vector<8x128xf32>,
    %c0_43 = arith.constant 0 : index
    %c0_44 = arith.constant 0 : index
    %74 = vector.load %arg14[%c0_43, %c0_44] : memref<8x128xf32, #tpu.memory_space<vmem>>, vector<8x128xf32>
    tpu.vector_store %arg14[%c0_43, %c0_44], %40 {strides = array<i32>} : memref<8x128xf32, #tpu.memory_space<vmem>>, vector<8x128xf32>,
    return
  }
  func.func @transform_0(%arg0: i32) -> (i32, i32) {
    %c0_i32 = arith.constant 0 : i32
    %c0_i32_0 = arith.constant 0 : i32
    return %arg0, %c0_i32 : i32, i32
  }
  func.func @transform_1(%arg0: i32) -> (i32, i32) {
    %c0_i32 = arith.constant 0 : i32
    %c0_i32_0 = arith.constant 0 : i32
    %c0_i32_1 = arith.constant 0 : i32
    return %c0_i32, %c0_i32_0 : i32, i32
  }
  func.func @transform_2(%arg0: i32) -> (i32, i32) {
    %c0_i32 = arith.constant 0 : i32
    %c0_i32_0 = arith.constant 0 : i32
    %c0_i32_1 = arith.constant 0 : i32
    return %c0_i32, %c0_i32_0 : i32, i32
  }
  func.func @transform_3(%arg0: i32) -> (i32, i32) {
    %c0_i32 = arith.constant 0 : i32
    %c0_i32_0 = arith.constant 0 : i32
    %c0_i32_1 = arith.constant 0 : i32
    return %c0_i32, %c0_i32_0 : i32, i32
  }
  func.func @transform_4(%arg0: i32) -> (i32, i32) {
    %c0_i32 = arith.constant 0 : i32
    %c0_i32_0 = arith.constant 0 : i32
    %c0_i32_1 = arith.constant 0 : i32
    return %c0_i32, %c0_i32_0 : i32, i32
  }
  func.func @transform_5(%arg0: i32) -> (i32, i32) {
    %c0_i32 = arith.constant 0 : i32
    %c0_i32_0 = arith.constant 0 : i32
    %c0_i32_1 = arith.constant 0 : i32
    return %c0_i32, %c0_i32_0 : i32, i32
  }
  func.func @transform_6(%arg0: i32) -> (i32, i32) {
    %c0_i32 = arith.constant 0 : i32
    %c0_i32_0 = arith.constant 0 : i32
    %c0_i32_1 = arith.constant 0 : i32
    return %c0_i32, %c0_i32_0 : i32, i32
  }
  func.func @transform_7(%arg0: i32) -> (i32, i32) {
    %c0_i32 = arith.constant 0 : i32
    %c0_i32_0 = arith.constant 0 : i32
    %c0_i32_1 = arith.constant 0 : i32
    return %c0_i32, %c0_i32_0 : i32, i32
  }
  func.func @transform_8(%arg0: i32) -> (i32, i32) {
    %c0_i32 = arith.constant 0 : i32
    %c0_i32_0 = arith.constant 0 : i32
    %c0_i32_1 = arith.constant 0 : i32
    return %c0_i32, %c0_i32_0 : i32, i32
  }
  func.func @transform_9(%arg0: i32) -> (i32, i32) {
    %c0_i32 = arith.constant 0 : i32
    %c0_i32_0 = arith.constant 0 : i32
    return %arg0, %c0_i32 : i32, i32
  }
  func.func @transform_10(%arg0: i32) -> (i32, i32) {
    %c0_i32 = arith.constant 0 : i32
    %c0_i32_0 = arith.constant 0 : i32
    return %arg0, %c0_i32 : i32, i32
  }
  func.func @transform_11(%arg0: i32) -> (i32, i32) {
    %c0_i32 = arith.constant 0 : i32
    %c0_i32_0 = arith.constant 0 : i32
    return %arg0, %c0_i32 : i32, i32
  }
  func.func @transform_12(%arg0: i32) -> (i32, i32) {
    %c0_i32 = arith.constant 0 : i32
    %c0_i32_0 = arith.constant 0 : i32
    return %arg0, %c0_i32 : i32, i32
  }
  func.func @transform_13(%arg0: i32) -> (i32, i32) {
    %c0_i32 = arith.constant 0 : i32
    %c0_i32_0 = arith.constant 0 : i32
    return %arg0, %c0_i32 : i32, i32
  }
}

</mosaic_0001>

<llo_original>
// kernel: tpu_custom_call.1
$region0: #{tpu_custom_call.1}
  #allocation0 [shape = 'u32[]', space=smem, size = 0x4, offset = 0x4, fixed_abs, tag = 'smem constant byte address 0x4 - core index']
  #allocation1 [shape = 'u32[72,128]{1,0:T(1,128)}', space=vmem, size = 0x9000, scoped, tag = 'internal scratch']
  %s0 = inlined_call_operand.hbm [shape: f32[8,16], index: 0, kind: input, shape index: {}]
  %s1 = inlined_call_operand.hbm [shape: bf16[16,128], index: 1, kind: input, shape index: {}]
  %s2 = inlined_call_operand.hbm [shape: f32[1,128], index: 2, kind: input, shape index: {}]
  %s3 = inlined_call_operand.hbm [shape: bf16[128,128], index: 3, kind: input, shape index: {}]
  %s4 = inlined_call_operand.hbm [shape: f32[1,128], index: 4, kind: input, shape index: {}]
  %s5 = inlined_call_operand.hbm [shape: bf16[128,128], index: 5, kind: input, shape index: {}]
  %s6 = inlined_call_operand.hbm [shape: f32[1,128], index: 6, kind: input, shape index: {}]
  %s7 = inlined_call_operand.hbm [shape: bf16[128,128], index: 7, kind: input, shape index: {}]
  %s8 = inlined_call_operand.hbm [shape: f32[1,128], index: 8, kind: input, shape index: {}]
  %s9 = inlined_call_operand.vmem [shape: f32[8,128], index: 9, kind: input, shape index: {}]
  %s10 = inlined_call_operand.hbm [shape: f32[8,128], index: 10, kind: output, shape index: {0}]
  %s11 = inlined_call_operand.vmem [shape: f32[8,1], index: 11, kind: output, shape index: {1}]
  %s12 = inlined_call_operand.hbm [shape: f32[8,128], index: 12, kind: output, shape index: {2}]
  %s13 = inlined_call_operand.hbm [shape: f32[8,128], index: 13, kind: output, shape index: {3}]
  %14 = xla_tuple %s10, %s11, %s12, %s13
  %s15 = sld [smem:[#allocation0]]
  $region110: #{tpu_custom_call.1} parent=0
    _
  %s17 = ssub.s32 1, %s15
  %s18 = scalar_select 0, %s17, %s15
  $region1: #{tpu_custom_call.1} parent=0
    #allocation2 [shape = 'u8[4096]{0}', space=vmem, size = 0x1000, scoped, tag = 'input window, operand 0, single buffered']
    #allocation3 [shape = 's32[1]{0}', space=sflag, size = 0x4, scoped, tag = 'scoped memory for tpu_custom_call.1']
    #allocation4 [shape = 's32[1]{0}', space=sflag, size = 0x4, scoped, tag = 'scoped memory for tpu_custom_call.1']
    #allocation5 [shape = 'u8[4096]{0}', space=vmem, size = 0x1000, scoped, tag = 'input window, operand 1, single buffered']
    #allocation6 [shape = 's32[1]{0}', space=sflag, size = 0x4, scoped, tag = 'scoped memory for tpu_custom_call.1']
    #allocation7 [shape = 'u8[512]{0}', space=vmem, size = 0x400, scoped, tag = 'input window, operand 2, single buffered']
    #allocation8 [shape = 'u8[32768]{0}', space=vmem, size = 0x8000, scoped, tag = 'input window, operand 3, single buffered']
    #allocation9 [shape = 's32[1]{0}', space=sflag, size = 0x4, scoped, tag = 'scoped memory for tpu_custom_call.1']
    #allocation10 [shape = 'u8[512]{0}', space=vmem, size = 0x400, scoped, tag = 'input window, operand 4, single buffered']
    #allocation11 [shape = 'u8[32768]{0}', space=vmem, size = 0x8000, scoped, tag = 'input window, operand 5, single buffered']
    #allocation12 [shape = 's32[1]{0}', space=sflag, size = 0x4, scoped, tag = 'scoped memory for tpu_custom_call.1']
    #allocation13 [shape = 'u8[512]{0}', space=vmem, size = 0x400, scoped, tag = 'input window, operand 6, single buffered']
    #allocation14 [shape = 'u8[32768]{0}', space=vmem, size = 0x8000, scoped, tag = 'input window, operand 7, single buffered']
    #allocation15 [shape = 's32[1]{0}', space=sflag, size = 0x4, scoped, tag = 'scoped memory for tpu_custom_call.1']
    #allocation16 [shape = 'u8[512]{0}', space=vmem, size = 0x400, scoped, tag = 'input window, operand 8, single buffered']
    #allocation17 [shape = 'u8[4096]{0}', space=vmem, size = 0x1000, scoped, tag = 'output window, operand 0, single buffered']
    #allocation18 [shape = 'u8[4096]{0}', space=vmem, size = 0x1000, scoped, tag = 'output window, operand 2, single buffered']
    #allocation19 [shape = 's32[1]{0}', space=sflag, size = 0x4, scoped, tag = 'scoped memory for tpu_custom_call.1']
    #allocation20 [shape = 'u8[4096]{0}', space=vmem, size = 0x1000, scoped, tag = 'output window, operand 3, single buffered']
    %19 = vsyncpa [#allocation3], 0
    %20 = vsyncpa [#allocation6], 0
    %21 = vsyncpa [#allocation9], 0
    %22 = vsyncpa [#allocation12], 0
    %23 = vsyncpa [#allocation15], 0
    %24 = vsyncpa [#allocation4], 0
    %25 = vsyncpa [#allocation19], 0
    // Predicated region
    $region2: #{tpu_custom_call.1} parent=1 // pred_check
      _
    $region3: #{tpu_custom_call.1} parent=1 // pred_check_branch
      %27 = sbr.rel (0) target = $region5
    $region4: #{tpu_custom_call.1} parent=1 // pred_region
      %29 = vsyncadd [#allocation3], 0
      %s31 = sshll.u32 %s0, 4
      %s32 = int_to_ptr.hbm [resolvable:$true] %s31
      %s33 = sshll.u32 [#allocation2], 4
      %s34 = int_to_ptr.vmem [resolvable:$true] %s33
      %36 = dma.hbm_to_vmem [thread:$0]  %s32, 128, %s34, [#allocation3]
    $region5: #{tpu_custom_call.1} parent=1 // pred_fallthru
      _
    // Predicated region
    $region6: #{tpu_custom_call.1} parent=1 // pred_check
      _
    $region7: #{tpu_custom_call.1} parent=1 // pred_check_branch
      %38 = sbr.rel (0) target = $region9
    $region8: #{tpu_custom_call.1} parent=1 // pred_region
      %40 = vsyncadd [#allocation6], 0
      %s41 = sshll.u32 %s1, 4
      %s42 = int_to_ptr.hbm [resolvable:$true] %s41
      %s43 = sshll.u32 [#allocation5], 4
      %s44 = int_to_ptr.vmem [resolvable:$true] %s43
      %49 = dma.hbm_to_vmem [thread:$0]  %s42, 128, %s44, [#allocation6], 64, 64, 4
    $region9: #{tpu_custom_call.1} parent=1 // pred_fallthru
      _
    // Predicated region
    $region10: #{tpu_custom_call.1} parent=1 // pred_check
      _
    $region11: #{tpu_custom_call.1} parent=1 // pred_check_branch
      %51 = sbr.rel (0) target = $region13
    $region12: #{tpu_custom_call.1} parent=1 // pred_region
      %53 = vsyncadd [#allocation6], 0
      %s55 = sshll.u32 %s2, 4
      %s56 = int_to_ptr.hbm [resolvable:$true] %s55
      %s57 = sshll.u32 [#allocation7], 4
      %s58 = int_to_ptr.vmem [resolvable:$true] %s57
      %60 = dma.hbm_to_vmem [thread:$0]  %s56, 16, %s58, [#allocation6]
    $region13: #{tpu_custom_call.1} parent=1 // pred_fallthru
      _
    // Predicated region
    $region14: #{tpu_custom_call.1} parent=1 // pred_check
      _
    $region15: #{tpu_custom_call.1} parent=1 // pred_check_branch
      %62 = sbr.rel (0) target = $region17
    $region16: #{tpu_custom_call.1} parent=1 // pred_region
      %64 = vsyncadd [#allocation9], 0
      %s65 = sshll.u32 %s3, 4
      %s66 = int_to_ptr.hbm [resolvable:$true] %s65
      %s67 = sshll.u32 [#allocation8], 4
      %s68 = int_to_ptr.vmem [resolvable:$true] %s67
      %73 = dma.hbm_to_vmem [thread:$0]  %s66, 1024, %s68, [#allocation9], 64, 64, 4
    $region17: #{tpu_custom_call.1} parent=1 // pred_fallthru
      _
    // Predicated region
    $region18: #{tpu_custom_call.1} parent=1 // pred_check
      _
    $region19: #{tpu_custom_call.1} parent=1 // pred_check_branch
      %75 = sbr.rel (0) target = $region21
    $region20: #{tpu_custom_call.1} parent=1 // pred_region
      %77 = vsyncadd [#allocation9], 0
      %s79 = sshll.u32 %s4, 4
      %s80 = int_to_ptr.hbm [resolvable:$true] %s79
      %s81 = sshll.u32 [#allocation10], 4
      %s82 = int_to_ptr.vmem [resolvable:$true] %s81
      %84 = dma.hbm_to_vmem [thread:$0]  %s80, 16, %s82, [#allocation9]
    $region21: #{tpu_custom_call.1} parent=1 // pred_fallthru
      _
    // Predicated region
    $region22: #{tpu_custom_call.1} parent=1 // pred_check
      _
    $region23: #{tpu_custom_call.1} parent=1 // pred_check_branch
      %86 = sbr.rel (0) target = $region25
    $region24: #{tpu_custom_call.1} parent=1 // pred_region
      %88 = vsyncadd [#allocation12], 0
      %s89 = sshll.u32 %s5, 4
      %s90 = int_to_ptr.hbm [resolvable:$true] %s89
      %s91 = sshll.u32 [#allocation11], 4
      %s92 = int_to_ptr.vmem [resolvable:$true] %s91
      %97 = dma.hbm_to_vmem [thread:$0]  %s90, 1024, %s92, [#allocation12], 64, 64, 4
    $region25: #{tpu_custom_call.1} parent=1 // pred_fallthru
      _
    // Predicated region
    $region26: #{tpu_custom_call.1} parent=1 // pred_check
      _
    $region27: #{tpu_custom_call.1} parent=1 // pred_check_branch
      %99 = sbr.rel (0) target = $region29
    $region28: #{tpu_custom_call.1} parent=1 // pred_region
      %101 = vsyncadd [#allocation12], 0
      %s103 = sshll.u32 %s6, 4
      %s104 = int_to_ptr.hbm [resolvable:$true] %s103
      %s105 = sshll.u32 [#allocation13], 4
      %s106 = int_to_ptr.vmem [resolvable:$true] %s105
      %108 = dma.hbm_to_vmem [thread:$0]  %s104, 16, %s106, [#allocation12]
    $region29: #{tpu_custom_call.1} parent=1 // pred_fallthru
      _
    // Predicated region
    $region30: #{tpu_custom_call.1} parent=1 // pred_check
      _
    $region31: #{tpu_custom_call.1} parent=1 // pred_check_branch
      %110 = sbr.rel (0) target = $region33
    $region32: #{tpu_custom_call.1} parent=1 // pred_region
      %112 = vsyncadd [#allocation15], 0
      %s113 = sshll.u32 %s7, 4
      %s114 = int_to_ptr.hbm [resolvable:$true] %s113
      %s115 = sshll.u32 [#allocation14], 4
      %s116 = int_to_ptr.vmem [resolvable:$true] %s115
      %121 = dma.hbm_to_vmem [thread:$0]  %s114, 1024, %s116, [#allocation15], 64, 64, 4
    $region33: #{tpu_custom_call.1} parent=1 // pred_fallthru
      _
    // Predicated region
    $region34: #{tpu_custom_call.1} parent=1 // pred_check
      _
    $region35: #{tpu_custom_call.1} parent=1 // pred_check_branch
      %123 = sbr.rel (0) target = $region37
    $region36: #{tpu_custom_call.1} parent=1 // pred_region
      %125 = vsyncadd [#allocation15], 0
      %s127 = sshll.u32 %s8, 4
      %s128 = int_to_ptr.hbm [resolvable:$true] %s127
      %s129 = sshll.u32 [#allocation16], 4
      %s130 = int_to_ptr.vmem [resolvable:$true] %s129
      %132 = dma.hbm_to_vmem [thread:$0]  %s128, 16, %s130, [#allocation15]
    $region37: #{tpu_custom_call.1} parent=1 // pred_fallthru
      _
    // Predicated region
    $region38: #{tpu_custom_call.1} parent=1 // pred_check
      _
    $region39: #{tpu_custom_call.1} parent=1 // pred_check_branch
      %134 = sbr.rel (0) target = $region41
    $region40: #{tpu_custom_call.1} parent=1 // pred_region
      _
    $region41: #{tpu_custom_call.1} parent=1 // pred_fallthru
      _
    // Predicated region
    $region42: #{tpu_custom_call.1} parent=1 // pred_check
      _
    $region43: #{tpu_custom_call.1} parent=1 // pred_check_branch
      %136 = sbr.rel (0) target = $region45
    $region44: #{tpu_custom_call.1} parent=1 // pred_region
      %138 = dma.done [#allocation3], 128
    $region45: #{tpu_custom_call.1} parent=1 // pred_fallthru
      _
    // Predicated region
    $region46: #{tpu_custom_call.1} parent=1 // pred_check
      _
    $region47: #{tpu_custom_call.1} parent=1 // pred_check_branch
      %140 = sbr.rel (0) target = $region49
    $region48: #{tpu_custom_call.1} parent=1 // pred_region
      %142 = dma.done [#allocation6], 128
    $region49: #{tpu_custom_call.1} parent=1 // pred_fallthru
      _
    // Predicated region
    $region50: #{tpu_custom_call.1} parent=1 // pred_check
      _
    $region51: #{tpu_custom_call.1} parent=1 // pred_check_branch
      %144 = sbr.rel (0) target = $region53
    $region52: #{tpu_custom_call.1} parent=1 // pred_region
      %146 = dma.done [#allocation6], 16
    $region53: #{tpu_custom_call.1} parent=1 // pred_fallthru
      _
    // Predicated region
    $region54: #{tpu_custom_call.1} parent=1 // pred_check
      _
    $region55: #{tpu_custom_call.1} parent=1 // pred_check_branch
      %148 = sbr.rel (0) target = $region57
    $region56: #{tpu_custom_call.1} parent=1 // pred_region
      %150 = dma.done [#allocation9], 1024
    $region57: #{tpu_custom_call.1} parent=1 // pred_fallthru
      _
    // Predicated region
    $region58: #{tpu_custom_call.1} parent=1 // pred_check
      _
    $region59: #{tpu_custom_call.1} parent=1 // pred_check_branch
      %152 = sbr.rel (0) target = $region61
    $region60: #{tpu_custom_call.1} parent=1 // pred_region
      %154 = dma.done [#allocation9], 16
    $region61: #{tpu_custom_call.1} parent=1 // pred_fallthru
      _
    // Predicated region
    $region62: #{tpu_custom_call.1} parent=1 // pred_check
      _
    $region63: #{tpu_custom_call.1} parent=1 // pred_check_branch
      %156 = sbr.rel (0) target = $region65
    $region64: #{tpu_custom_call.1} parent=1 // pred_region
      %158 = dma.done [#allocation12], 1024
    $region65: #{tpu_custom_call.1} parent=1 // pred_fallthru
      _
    // Predicated region
    $region66: #{tpu_custom_call.1} parent=1 // pred_check
      _
    $region67: #{tpu_custom_call.1} parent=1 // pred_check_branch
      %160 = sbr.rel (0) target = $region69
    $region68: #{tpu_custom_call.1} parent=1 // pred_region
      %162 = dma.done [#allocation12], 16
    $region69: #{tpu_custom_call.1} parent=1 // pred_fallthru
      _
    // Predicated region
    $region70: #{tpu_custom_call.1} parent=1 // pred_check
      _
    $region71: #{tpu_custom_call.1} parent=1 // pred_check_branch
      %164 = sbr.rel (0) target = $region73
    $region72: #{tpu_custom_call.1} parent=1 // pred_region
      %166 = dma.done [#allocation15], 1024
    $region73: #{tpu_custom_call.1} parent=1 // pred_fallthru
      _
    // Predicated region
    $region74: #{tpu_custom_call.1} parent=1 // pred_check
      _
    $region75: #{tpu_custom_call.1} parent=1 // pred_check_branch
      %168 = sbr.rel (0) target = $region77
    $region76: #{tpu_custom_call.1} parent=1 // pred_region
      %170 = dma.done [#allocation15], 16
    $region77: #{tpu_custom_call.1} parent=1 // pred_fallthru
      _
    %v172 = vld [vmem:[#allocation2] sm:$0xff]
    %v173 = vpack.c.bf16 %v172, %v172
    %v174 = vld [vmem:[#allocation5] sm:$0xf]
    %v175 = vld [vmem:[#allocation5 + $0x4] sm:$0xf]
    %v176 = vld [vmem:[#allocation7] sm:$0x1]
    %v178 = vperm.slane %v176, 0
    %v182 = vunpack.c.l.b16 %v174
    %v183 = vunpack.c.l.b16 %v175
    %v184 = vpack.c.b16 %v183, %v182
    %vm186 = vcmask 130048
    %v188 = vsel %vm186, %v173, 0
    %190 = vmatpush.bf16.msra.mxu0 0
    %191 = vmatpush.bf16.msra.mxu0 0
    %192 = vmatpush.bf16.msra.mxu0 0
    %193 = vmatpush.bf16.msra.mxu0 0
    %194 = vmatpush.bf16.msra.mxu0 0
    %195 = vmatpush.bf16.msra.mxu0 0
    %196 = vmatpush.bf16.msra.mxu0 0
    %197 = vmatpush.bf16.msra.mxu0 %v184
    %198 = vmatmul.bf16.gmra.mxu0 %v188
    %v199 = vpop.f32.mrf.mxu0
    %v200 = vadd.f32 %v178, %v199
    %v201 = vpop.f32.mrf.mxu0
    %202 = vdwg.mxu0
    %vm203 = vcmp.gt.f32.partialorder %v200, 0.0
    %v204 = vmul.f32 %v200, 0.01
    %v205 = vsel %vm203, %v200, %v204
    %v206 = vpack.c.bf16 %v205, %v205
    %v207 = vld [vmem:[#allocation8] sm:$0xf]
    %v208 = vld [vmem:[#allocation8 + $0x4] sm:$0xf]
    %v209 = vld [vmem:[#allocation8 + $0x8] sm:$0xf]
    %v210 = vld [vmem:[#allocation8 + $0xc] sm:$0xf]
    %v211 = vld [vmem:[#allocation8 + $0x10] sm:$0xf]
    %v212 = vld [vmem:[#allocation8 + $0x14] sm:$0xf]
    %v213 = vld [vmem:[#allocation8 + $0x18] sm:$0xf]
    %v214 = vld [vmem:[#allocation8 + $0x1c] sm:$0xf]
    %v215 = vld [vmem:[#allocation8 + $0x20] sm:$0xf]
    %v216 = vld [vmem:[#allocation8 + $0x24] sm:$0xf]
    %v217 = vld [vmem:[#allocation8 + $0x28] sm:$0xf]
    %v218 = vld [vmem:[#allocation8 + $0x2c] sm:$0xf]
    %v219 = vld [vmem:[#allocation8 + $0x30] sm:$0xf]
    %v220 = vld [vmem:[#allocation8 + $0x34] sm:$0xf]
    %v221 = vld [vmem:[#allocation8 + $0x38] sm:$0xf]
    %v222 = vld [vmem:[#allocation8 + $0x3c] sm:$0xf]
    %v223 = vld [vmem:[#allocation10] sm:$0x1]
    %v225 = vperm.slane %v223, 0
    %v243 = vunpack.c.l.b16 %v207
    %v244 = vunpack.c.l.b16 %v208
    %v245 = vunpack.c.l.b16 %v209
    %v246 = vunpack.c.l.b16 %v210
    %v247 = vunpack.c.l.b16 %v211
    %v248 = vunpack.c.l.b16 %v212
    %v249 = vunpack.c.l.b16 %v213
    %v250 = vunpack.c.l.b16 %v214
    %v251 = vunpack.c.l.b16 %v215
    %v252 = vunpack.c.l.b16 %v216
    %v253 = vunpack.c.l.b16 %v217
    %v254 = vunpack.c.l.b16 %v218
    %v255 = vunpack.c.l.b16 %v219
    %v256 = vunpack.c.l.b16 %v220
    %v257 = vunpack.c.l.b16 %v221
    %v258 = vunpack.c.l.b16 %v222
    %v259 = vpack.c.b16 %v244, %v243
    %v260 = vpack.c.b16 %v246, %v245
    %v261 = vpack.c.b16 %v248, %v247
    %v262 = vpack.c.b16 %v250, %v249
    %v263 = vpack.c.b16 %v252, %v251
    %v264 = vpack.c.b16 %v254, %v253
    %v265 = vpack.c.b16 %v256, %v255
    %v266 = vpack.c.b16 %v258, %v257
    %275 = vmatpush.bf16.msra.mxu0 %v266
    %276 = vmatpush.bf16.msra.mxu0 %v265
    %277 = vmatpush.bf16.msra.mxu0 %v264
    %278 = vmatpush.bf16.msra.mxu0 %v263
    %279 = vmatpush.bf16.msra.mxu0 %v262
    %280 = vmatpush.bf16.msra.mxu0 %v261
    %281 = vmatpush.bf16.msra.mxu0 %v260
    %282 = vmatpush.bf16.msra.mxu0 %v259
    %283 = vmatmul.bf16.gmra.mxu0 %v206
    %v284 = vpop.f32.mrf.mxu0
    %v285 = vadd.f32 %v225, %v284
    %v286 = vpop.f32.mrf.mxu0
    %287 = vdwg.mxu0
    %vm288 = vcmp.gt.f32.partialorder %v285, 0.0
    %v289 = vmul.f32 %v285, 0.01
    %v290 = vsel %vm288, %v285, %v289
    %v291 = vpack.c.bf16 %v290, %v290
    %v292 = vld [vmem:[#allocation11] sm:$0xf]
    %v293 = vld [vmem:[#allocation11 + $0x4] sm:$0xf]
    %v294 = vld [vmem:[#allocation11 + $0x8] sm:$0xf]
    %v295 = vld [vmem:[#allocation11 + $0xc] sm:$0xf]
    %v296 = vld [vmem:[#allocation11 + $0x10] sm:$0xf]
    %v297 = vld [vmem:[#allocation11 + $0x14] sm:$0xf]
    %v298 = vld [vmem:[#allocation11 + $0x18] sm:$0xf]
    %v299 = vld [vmem:[#allocation11 + $0x1c] sm:$0xf]
    %v300 = vld [vmem:[#allocation11 + $0x20] sm:$0xf]
    %v301 = vld [vmem:[#allocation11 + $0x24] sm:$0xf]
    %v302 = vld [vmem:[#allocation11 + $0x28] sm:$0xf]
    %v303 = vld [vmem:[#allocation11 + $0x2c] sm:$0xf]
    %v304 = vld [vmem:[#allocation11 + $0x30] sm:$0xf]
    %v305 = vld [vmem:[#allocation11 + $0x34] sm:$0xf]
    %v306 = vld [vmem:[#allocation11 + $0x38] sm:$0xf]
    %v307 = vld [vmem:[#allocation11 + $0x3c] sm:$0xf]
    %v308 = vld [vmem:[#allocation13] sm:$0x1]
    %v310 = vperm.slane %v308, 0
    %v328 = vunpack.c.l.b16 %v292
    %v329 = vunpack.c.l.b16 %v293
    %v330 = vunpack.c.l.b16 %v294
    %v331 = vunpack.c.l.b16 %v295
    %v332 = vunpack.c.l.b16 %v296
    %v333 = vunpack.c.l.b16 %v297
    %v334 = vunpack.c.l.b16 %v298
    %v335 = vunpack.c.l.b16 %v299
    %v336 = vunpack.c.l.b16 %v300
    %v337 = vunpack.c.l.b16 %v301
    %v338 = vunpack.c.l.b16 %v302
    %v339 = vunpack.c.l.b16 %v303
    %v340 = vunpack.c.l.b16 %v304
    %v341 = vunpack.c.l.b16 %v305
    %v342 = vunpack.c.l.b16 %v306
    %v343 = vunpack.c.l.b16 %v307
    %v344 = vpack.c.b16 %v329, %v328
    %v345 = vpack.c.b16 %v331, %v330
    %v346 = vpack.c.b16 %v333, %v332
    %v347 = vpack.c.b16 %v335, %v334
    %v348 = vpack.c.b16 %v337, %v336
    %v349 = vpack.c.b16 %v339, %v338
    %v350 = vpack.c.b16 %v341, %v340
    %v351 = vpack.c.b16 %v343, %v342
    %360 = vmatpush.bf16.msra.mxu0 %v351
    %361 = vmatpush.bf16.msra.mxu0 %v350
    %362 = vmatpush.bf16.msra.mxu0 %v349
    %363 = vmatpush.bf16.msra.mxu0 %v348
    %364 = vmatpush.bf16.msra.mxu0 %v347
    %365 = vmatpush.bf16.msra.mxu0 %v346
    %366 = vmatpush.bf16.msra.mxu0 %v345
    %367 = vmatpush.bf16.msra.mxu0 %v344
    %368 = vmatmul.bf16.gmra.mxu0 %v291
    %v369 = vpop.f32.mrf.mxu0
    %v370 = vadd.f32 %v310, %v369
    %v371 = vpop.f32.mrf.mxu0
    %372 = vdwg.mxu0
    %v373 = vld [vmem:[#allocation14] sm:$0xf]
    %v374 = vld [vmem:[#allocation14 + $0x4] sm:$0xf]
    %v375 = vld [vmem:[#allocation14 + $0x8] sm:$0xf]
    %v376 = vld [vmem:[#allocation14 + $0xc] sm:$0xf]
    %v377 = vld [vmem:[#allocation14 + $0x10] sm:$0xf]
    %v378 = vld [vmem:[#allocation14 + $0x14] sm:$0xf]
    %v379 = vld [vmem:[#allocation14 + $0x18] sm:$0xf]
    %v380 = vld [vmem:[#allocation14 + $0x1c] sm:$0xf]
    %v381 = vld [vmem:[#allocation14 + $0x20] sm:$0xf]
    %v382 = vld [vmem:[#allocation14 + $0x24] sm:$0xf]
    %v383 = vld [vmem:[#allocation14 + $0x28] sm:$0xf]
    %v384 = vld [vmem:[#allocation14 + $0x2c] sm:$0xf]
    %v385 = vld [vmem:[#allocation14 + $0x30] sm:$0xf]
    %v386 = vld [vmem:[#allocation14 + $0x34] sm:$0xf]
    %v387 = vld [vmem:[#allocation14 + $0x38] sm:$0xf]
    %v388 = vld [vmem:[#allocation14 + $0x3c] sm:$0xf]
    %v389 = vld [vmem:[#allocation16] sm:$0x1]
    %v391 = vperm.slane %v389, 0
    %v409 = vunpack.c.l.b16 %v373
    %v410 = vunpack.c.l.b16 %v374
    %v411 = vunpack.c.l.b16 %v375
    %v412 = vunpack.c.l.b16 %v376
    %v413 = vunpack.c.l.b16 %v377
    %v414 = vunpack.c.l.b16 %v378
    %v415 = vunpack.c.l.b16 %v379
    %v416 = vunpack.c.l.b16 %v380
    %v417 = vunpack.c.l.b16 %v381
    %v418 = vunpack.c.l.b16 %v382
    %v419 = vunpack.c.l.b16 %v383
    %v420 = vunpack.c.l.b16 %v384
    %v421 = vunpack.c.l.b16 %v385
    %v422 = vunpack.c.l.b16 %v386
    %v423 = vunpack.c.l.b16 %v387
    %v424 = vunpack.c.l.b16 %v388
    %v425 = vpack.c.b16 %v410, %v409
    %v426 = vpack.c.b16 %v412, %v411
    %v427 = vpack.c.b16 %v414, %v413
    %v428 = vpack.c.b16 %v416, %v415
    %v429 = vpack.c.b16 %v418, %v417
    %v430 = vpack.c.b16 %v420, %v419
    %v431 = vpack.c.b16 %v422, %v421
    %v432 = vpack.c.b16 %v424, %v423
    %441 = vmatpush.bf16.msra.mxu0 %v432
    %442 = vmatpush.bf16.msra.mxu0 %v431
    %443 = vmatpush.bf16.msra.mxu0 %v430
    %444 = vmatpush.bf16.msra.mxu0 %v429
    %445 = vmatpush.bf16.msra.mxu0 %v428
    %446 = vmatpush.bf16.msra.mxu0 %v427
    %447 = vmatpush.bf16.msra.mxu0 %v426
    %448 = vmatpush.bf16.msra.mxu0 %v425
    %449 = vmatmul.bf16.gmra.mxu0 %v291
    %v450 = vpop.f32.mrf.mxu0
    %v451 = vadd.f32 %v391, %v450
    %v452 = vpop.f32.mrf.mxu0
    %453 = vdwg.mxu0
    %v454 = vtanh.pop %v451
    %v455 = vadd.f32 %v454, 1.0
    %v456 = vmul.f32 %v455, 11.0
    %v457 = vadd.f32 %v456, -20.0
    %v458 = vmul.f32 %v457, 1.442695
    %v459 = vpow.pop %v458
    %v460 = vld [vmem:[%s9] sm:$0xff]
    %v461 = vmul.f32 %v459, %v460
    %v462 = vadd.f32 %v370, %v461
    %v463 = vtanh.pop %v370
    %v464 = vtanh.pop %v462
    %v465 = vmul.f32 %v460, %v460
    %v466 = vmul.f32 %v465, -0.5
    %v467 = vsub.f32 %v466, %v457
    %v468 = vsub.f32 %v467, 0.9189385
    %v469 = vmul.f32 %v464, %v464
    %v470 = vsub.f32 1.0, %v469
    %v471 = vmax.f32 %v470, 0.0
    %v472 = vmin.f32 %v471, 1.0
    %v473 = vadd.f32 %v472, 1e-06
    %v474 = vlog2.pop %v473
    %v475 = vmul.f32 %v474, 0.6931472
    %v476 = vsub.f32 %v468, %v475
    %v477 = vlaneseq
    %v478 = vand.u32 %v477, 127
    %vm479 = vcmp.lt.s32.totalorder %v478, 4
    %v480 = vsel %vm479, %v476, 0.0
    %481 = vst [vmem:[#allocation17] sm:$0xff] %v464
    %482 = vadd.xlane.f32.xlu0 %v480
    %v483 = vpop.xlane.xlu0 %482
    %vm484 = vcmask 7168
    %485 = vst.msk [vmem:[%s11] sm:$0xff] %vm484, %v483
    %486 = vst [vmem:[#allocation18] sm:$0xff] %v463
    %487 = vst [vmem:[#allocation20] sm:$0xff] %v457
    // Predicated region
    $region78: #{tpu_custom_call.1} parent=1 // pred_check
      _
    $region79: #{tpu_custom_call.1} parent=1 // pred_check_branch
      %489 = sbr.rel (0) target = $region81
    $region80: #{tpu_custom_call.1} parent=1 // pred_region
      %491 = vsyncadd [#allocation4], 0
      %s493 = sshll.u32 [#allocation17], 4
      %s494 = int_to_ptr.vmem [resolvable:$true] %s493
      %s495 = sshll.u32 %s10, 4
      %s496 = int_to_ptr.hbm [resolvable:$true] %s495
      %498 = dma.vmem_to_hbm [thread:$0]  %s494, 128, %s496, [#allocation4]
    $region81: #{tpu_custom_call.1} parent=1 // pred_fallthru
      _
    // Predicated region
    $region82: #{tpu_custom_call.1} parent=1 // pred_check
      _
    $region83: #{tpu_custom_call.1} parent=1 // pred_check_branch
      %500 = sbr.rel (0) target = $region85
    $region84: #{tpu_custom_call.1} parent=1 // pred_region
      _
    $region85: #{tpu_custom_call.1} parent=1 // pred_fallthru
      _
    // Predicated region
    $region86: #{tpu_custom_call.1} parent=1 // pred_check
      _
    $region87: #{tpu_custom_call.1} parent=1 // pred_check_branch
      %502 = sbr.rel (0) target = $region89
    $region88: #{tpu_custom_call.1} parent=1 // pred_region
      %504 = vsyncadd [#allocation19], 0
      %s506 = sshll.u32 [#allocation18], 4
      %s507 = int_to_ptr.vmem [resolvable:$true] %s506
      %s508 = sshll.u32 %s12, 4
      %s509 = int_to_ptr.hbm [resolvable:$true] %s508
      %511 = dma.vmem_to_hbm [thread:$0]  %s507, 128, %s509, [#allocation19]
    $region89: #{tpu_custom_call.1} parent=1 // pred_fallthru
      _
    // Predicated region
    $region90: #{tpu_custom_call.1} parent=1 // pred_check
      _
    $region91: #{tpu_custom_call.1} parent=1 // pred_check_branch
      %513 = sbr.rel (0) target = $region93
    $region92: #{tpu_custom_call.1} parent=1 // pred_region
      %515 = vsyncadd [#allocation19], 0
      %s517 = sshll.u32 [#allocation20], 4
      %s518 = int_to_ptr.vmem [resolvable:$true] %s517
      %s519 = sshll.u32 %s13, 4
      %s520 = int_to_ptr.hbm [resolvable:$true] %s519
      %522 = dma.vmem_to_hbm [thread:$0]  %s518, 128, %s520, [#allocation19]
    $region93: #{tpu_custom_call.1} parent=1 // pred_fallthru
      _
    // Predicated region
    $region94: #{tpu_custom_call.1} parent=1 // pred_check
      _
    $region95: #{tpu_custom_call.1} parent=1 // pred_check_branch
      %524 = sbr.rel (0) target = $region97
    $region96: #{tpu_custom_call.1} parent=1 // pred_region
      %526 = dma.done [#allocation4], 128
    $region97: #{tpu_custom_call.1} parent=1 // pred_fallthru
      _
    // Predicated region
    $region98: #{tpu_custom_call.1} parent=1 // pred_check
      _
    $region99: #{tpu_custom_call.1} parent=1 // pred_check_branch
      %528 = sbr.rel (0) target = $region101
    $region100: #{tpu_custom_call.1} parent=1 // pred_region
      _
    $region101: #{tpu_custom_call.1} parent=1 // pred_fallthru
      _
    // Predicated region
    $region102: #{tpu_custom_call.1} parent=1 // pred_check
      _
    $region103: #{tpu_custom_call.1} parent=1 // pred_check_branch
      %530 = sbr.rel (0) target = $region105
    $region104: #{tpu_custom_call.1} parent=1 // pred_region
      %532 = dma.done [#allocation19], 128
    $region105: #{tpu_custom_call.1} parent=1 // pred_fallthru
      _
    // Predicated region
    $region106: #{tpu_custom_call.1} parent=1 // pred_check
      _
    $region107: #{tpu_custom_call.1} parent=1 // pred_check_branch
      %534 = sbr.rel (0) target = $region109
    $region108: #{tpu_custom_call.1} parent=1 // pred_region
      %536 = dma.done [#allocation19], 128
    $region109: #{tpu_custom_call.1} parent=1 // pred_fallthru
      _
    %537 = vsyncpa [#allocation3], 1
    %538 = vsyncpa [#allocation6], 1
    %539 = vsyncpa [#allocation9], 1
    %540 = vsyncpa [#allocation12], 1
    %541 = vsyncpa [#allocation15], 1
    %542 = vsyncpa [#allocation4], 1
    %543 = vsyncpa [#allocation19], 1

</llo_original>
